<compile_context>
chip_gen: v7x
topology: tpu7x:2x2x1
jax: 0.10.0
libtpu: 0.0.40
codegen_flags: <defaults>
</compile_context>

<pallas_src>
import math
from functools import partial

import jax
import jax.numpy as jnp
from jax import lax
from jax.experimental import pallas as pl
from jax.experimental.pallas import tpu as pltpu


def _attention_head_kernel(x_ref, w_ref, b_ref, o_ref, *,
                           seq_len, d_model, f_pad):
    """One batch element per grid step.  All tiles live in VMEM."""
    S, Fp = seq_len, f_pad

    # ---- Fused QKV projection: one (S, D) @ (D, 3*Fp) matmul ----------------
    x2 = x_ref[...]                                            # (S, D_model)
    qkv = jnp.dot(x2, w_ref[...],
                  preferred_element_type=jnp.float32) + b_ref[...]   # (S, 3*Fp)

    inv_sqrt_d = 1.0 / math.sqrt(d_model)     # fold the scale into q
    # Whole-vreg slices (section starts are multiples of 128 lanes).
    q = qkv[:, 0 * Fp:1 * Fp] * inv_sqrt_d                     # (S, Fp)
    k = qkv[:, 1 * Fp:2 * Fp]                                  # (S, Fp)
    v = qkv[:, 2 * Fp:3 * Fp]                                  # (S, Fp)

    # ---- Scores: contract feature dims directly (q @ k.T, no transpose) -----
    # Zero-padded feature lanes contribute 0, so scores match the unpadded math.
    scores = lax.dot_general(q, k, (((1,), (1,)), ((), ())),
                             preferred_element_type=jnp.float32)      # (S, S)

    # Causal (lower-triangular) mask: col > row -> -inf.  2-D iotas only.
    row = lax.broadcasted_iota(jnp.int32, (S, S), 0)
    col = lax.broadcasted_iota(jnp.int32, (S, S), 1)
    scores = jnp.where(col <= row, scores, -jnp.inf)

    # ---- Numerically stable softmax with deferred normalization -------------
    m = jnp.max(scores, axis=-1, keepdims=True)
    e = jnp.exp(scores - m)
    s = jnp.sum(e, axis=-1, keepdims=True)                     # (S, 1)

    # Dropout on the attention matrix: identity in eval mode.

    out_unnorm = jnp.dot(e, v, preferred_element_type=jnp.float32)   # (S, Fp)
    # Exact reciprocal keeps the 1e-5 tolerance (padding lanes stay exactly 0).
    out = out_unnorm * pl.reciprocal(s, approx=False)

    o_ref[...] = out.astype(o_ref.dtype)                       # lane-dense (S, Fp)


def prepare_attention_params(wk, bk, wq, bq, wv, bv):
    """One-time (parameter-setup) fusion of the three Linear layers.

    PyTorch-style weights (F, D) are transposed to (D, F) and packed into a
    single (D, 3*F_pad) matrix with each section zero-padded to a 128-lane
    boundary so in-kernel slicing is vreg-aligned and padding is a no-op in
    the attention math.
    """
    F, D = wq.shape
    F_pad = ((F + 127) // 128) * 128

    w = jnp.zeros((D, 3 * F_pad), jnp.float32)
    w = w.at[:, 0 * F_pad:0 * F_pad + F].set(wq.T)
    w = w.at[:, 1 * F_pad:1 * F_pad + F].set(wk.T)
    w = w.at[:, 2 * F_pad:2 * F_pad + F].set(wv.T)

    b = jnp.zeros((1, 3 * F_pad), jnp.float32)
    b = b.at[0, 0 * F_pad:0 * F_pad + F].set(bq)
    b = b.at[0, 1 * F_pad:1 * F_pad + F].set(bk)
    b = b.at[0, 2 * F_pad:2 * F_pad + F].set(bv)

    return w, b, F, F_pad


def attention_head_forward(x, w_qkv, b_qkv, d_feature):
    """x: (B, S, D_model); w_qkv/b_qkv from prepare_attention_params()."""
    B, S, D_model = x.shape
    F_pad = w_qkv.shape[1] // 3

    itemsize = jnp.dtype(x.dtype).itemsize
    flops = B * (2 * S * D_model * 3 * F_pad + 2 * 2 * S * S * F_pad)
    bytes_accessed = (x.size + w_qkv.size + b_qkv.size + B * S * F_pad) * itemsize

    kernel = partial(_attention_head_kernel,
                     seq_len=S, d_model=D_model, f_pad=F_pad)

    out_padded = pl.pallas_call(
        kernel,
        out_shape=jax.ShapeDtypeStruct((B, S, F_pad), x.dtype),
        grid=(B,),                                   # one batch per step
        in_specs=[
            pl.BlockSpec((None, S, D_model), lambda b: (b, 0, 0)),   # x[b]
            pl.BlockSpec((D_model, 3 * F_pad), lambda b: (0, 0)),    # fused W_qkv
            pl.BlockSpec((1, 3 * F_pad), lambda b: (0, 0)),          # fused bias
        ],
        out_specs=pl.BlockSpec((None, S, F_pad), lambda b: (b, 0, 0)),
        compiler_params=pltpu.CompilerParams(
            dimension_semantics=("parallel",)),      # shard batch over TCs (v7x)
        cost_estimate=pl.CostEstimate(
            flops=flops, transcendentals=B * S * S,
            bytes_accessed=bytes_accessed),
    )(x, w_qkv, b_qkv)

    # Drop the zero lane-padding (cheap host/XLA-side slice).
    return out_padded[..., :d_feature]


def attention_head_reference(x, wk, bk, wq, bq, wv, bv):
    """Pure-JAX reference mirroring the PyTorch forward (mask=None, eval)."""
    B, S, D_model = x.shape
    k = x @ wk.T + bk
    q = x @ wq.T + bq
    v = x @ wv.T + bv
    att = q @ jnp.swapaxes(k, -2, -1)
    tril = jnp.tril(jnp.ones((S, S), dtype=bool))
    att = jnp.where(tril, att, -jnp.inf)
    att = att / math.sqrt(D_model)
    att = jax.nn.softmax(att, axis=-1)
    return att @ v


if __name__ == "__main__":
    # Small shapes consistent with the module: batch=2, seq=8, d_model=32, d_feature=16.
    B, S, D_MODEL, D_FEAT = 2, 8, 32, 16

    key = jax.random.PRNGKey(0)
    kx, kk, kbk, kq, kbq, kv, kbv = jax.random.split(key, 7)

    x = jax.random.normal(kx, (B, S, D_MODEL), dtype=jnp.float32)

    # Deterministic "Linear" parameters (PyTorch-style shapes: (out, in)).
    bound = 1.0 / math.sqrt(D_MODEL)
    wk = jax.random.uniform(kk, (D_FEAT, D_MODEL), jnp.float32, -bound, bound)
    bk = jax.random.uniform(kbk, (D_FEAT,), jnp.float32, -bound, bound)
    wq = jax.random.uniform(kq, (D_FEAT, D_MODEL), jnp.float32, -bound, bound)
    bq = jax.random.uniform(kbq, (D_FEAT,), jnp.float32, -bound, bound)
    wv = jax.random.uniform(kv, (D_FEAT, D_MODEL), jnp.float32, -bound, bound)
    bv = jax.random.uniform(kbv, (D_FEAT,), jnp.float32, -bound, bound)

    # One-time parameter fusion (would live at module-init time in a real model).
    w_qkv, b_qkv, _, _ = prepare_attention_params(wk, bk, wq, bq, wv, bv)

    out = attention_head_forward(x, w_qkv, b_qkv, D_FEAT)
    out = jax.block_until_ready(out)

    ref = attention_head_reference(x, wk, bk, wq, bq, wv, bv)
    assert out.shape == (B, S, D_FEAT)
    assert jnp.allclose(out, ref, atol=1e-5, rtol=1e-5), "mismatch vs reference"

    print("KERNEL_OK")
</pallas_src>

<mosaic_0001>
module attributes {stable_mosaic.version = 11 : i64} {
  func.func @_attention_head_kernel(%arg0: i32, %arg1: memref<1x8x32xf32, #tpu.memory_space<vmem>>, %arg2: memref<32x384xf32, #tpu.memory_space<vmem>>, %arg3: memref<1x384xf32, #tpu.memory_space<vmem>>, %arg4: memref<1x8x128xf32, #tpu.memory_space<vmem>>) attributes {dimension_semantics = [#tpu.dimension_semantics<parallel>], iteration_bounds = array<i64: 2>, scalar_prefetch = 0 : i64, scratch_operands = 0 : i64, tpu.core_type = #tpu.core_type<tc>, window_params = [{transform_indices = @transform_0, window_bounds = array<i64: 1, 8, 32>}, {pipeline_mode = #tpu.pipeline_mode<synchronous>, transform_indices = @transform_1, window_bounds = array<i64: 32, 384>}, {pipeline_mode = #tpu.pipeline_mode<synchronous>, transform_indices = @transform_2, window_bounds = array<i64: 1, 384>}, {transform_indices = @transform_3, window_bounds = array<i64: 1, 8, 128>}]} {
    %c0 = arith.constant 0 : index
    %c0_0 = arith.constant 0 : index
    %c0_1 = arith.constant 0 : index
    %0 = vector.load %arg1[%c0, %c0_0, %c0_1] : memref<1x8x32xf32, #tpu.memory_space<vmem>>, vector<1x8x32xf32>
    %1 = vector.shape_cast %0 : vector<1x8x32xf32> to vector<8x32xf32>
    %c0_2 = arith.constant 0 : index
    %c0_3 = arith.constant 0 : index
    %2 = vector.load %arg2[%c0_2, %c0_3] : memref<32x384xf32, #tpu.memory_space<vmem>>, vector<32x384xf32>
    %cst = arith.constant dense<0.000000e+00> : vector<8x384xf32>
    %3 = tpu.matmul %1, %2, %cst {dimension_numbers = #tpu.dot_dimension_numbers<[1], [0], [0], [1], [0, 0, 1, 1], [], []>} : vector<8x32xf32>, vector<32x384xf32>, vector<8x384xf32> -> vector<8x384xf32>
    %c0_4 = arith.constant 0 : index
    %c0_5 = arith.constant 0 : index
    %4 = vector.load %arg3[%c0_4, %c0_5] : memref<1x384xf32, #tpu.memory_space<vmem>>, vector<1x384xf32>
    %5 = vector.broadcast %4 : vector<1x384xf32> to vector<8x384xf32>
    %6 = arith.addf %3, %5 : vector<8x384xf32>
    %7 = vector.extract_strided_slice %6 {offsets = [0, 0], sizes = [8, 128], strides = [1, 1]} : vector<8x384xf32> to vector<8x128xf32>
    %cst_6 = arith.constant 0.176776692 : f32
    %8 = vector.broadcast %cst_6 : f32 to vector<8x128xf32>
    %9 = arith.mulf %7, %8 : vector<8x128xf32>
    %10 = vector.extract_strided_slice %6 {offsets = [0, 128], sizes = [8, 128], strides = [1, 1]} : vector<8x384xf32> to vector<8x128xf32>
    %11 = vector.extract_strided_slice %6 {offsets = [0, 256], sizes = [8, 128], strides = [1, 1]} : vector<8x384xf32> to vector<8x128xf32>
    %cst_7 = arith.constant dense<0.000000e+00> : vector<8x8xf32>
    %12 = tpu.matmul %9, %10, %cst_7 {dimension_numbers = #tpu.dot_dimension_numbers<[1], [1], [0], [0], [0, 0, 1, 0], [], []>} : vector<8x128xf32>, vector<8x128xf32>, vector<8x8xf32> -> vector<8x8xf32>
    %13 = tpu.iota {dimensions = array<i32: 0>} : vector<8x8xi32>
    %14 = tpu.iota {dimensions = array<i32: 1>} : vector<8x8xi32>
    %15 = arith.cmpi sle, %14, %13 : vector<8x8xi32>
    %cst_8 = arith.constant 0xFF800000 : f32
    %16 = vector.broadcast %cst_8 : f32 to vector<8x8xf32>
    %17 = arith.select %15, %12, %16 : vector<8x8xi1>, vector<8x8xf32>
    %cst_9 = arith.constant dense<0xFF800000> : vector<8xf32>
    %18 = vector.multi_reduction <maximumf>, %17, %cst_9 [1] : vector<8x8xf32> to vector<8xf32>
    %19 = vector.shape_cast %18 : vector<8xf32> to vector<8x1xf32>
    %20 = vector.broadcast %19 : vector<8x1xf32> to vector<8x8xf32>
    %21 = arith.subf %17, %20 : vector<8x8xf32>
    %22 = math.exp %21 : vector<8x8xf32>
    %cst_10 = arith.constant dense<0.000000e+00> : vector<8xf32>
    %23 = vector.multi_reduction <add>, %22, %cst_10 [1] : vector<8x8xf32> to vector<8xf32>
    %24 = vector.shape_cast %23 : vector<8xf32> to vector<8x1xf32>
    %cst_11 = arith.constant dense<0.000000e+00> : vector<8x128xf32>
    %25 = tpu.matmul %22, %11, %cst_11 {dimension_numbers = #tpu.dot_dimension_numbers<[1], [0], [0], [1], [0, 0, 1, 1], [], []>} : vector<8x8xf32>, vector<8x128xf32>, vector<8x128xf32> -> vector<8x128xf32>
    %26 = tpu.reciprocal %24 : vector<8x1xf32> -> vector<8x1xf32>
    %27 = vector.broadcast %26 : vector<8x1xf32> to vector<8x128xf32>
    %28 = arith.mulf %25, %27 : vector<8x128xf32>
    %c0_12 = arith.constant 0 : index
    %c0_13 = arith.constant 0 : index
    %c0_14 = arith.constant 0 : index
    %29 = vector.load %arg4[%c0_12, %c0_13, %c0_14] : memref<1x8x128xf32, #tpu.memory_space<vmem>>, vector<1x8x128xf32>
    %30 = vector.shape_cast %29 : vector<1x8x128xf32> to vector<8x128xf32>
    %31 = vector.shape_cast %28 : vector<8x128xf32> to vector<1x8x128xf32>
    tpu.vector_store %arg4[%c0_12, %c0_13, %c0_14], %31 {strides = array<i32>} : memref<1x8x128xf32, #tpu.memory_space<vmem>>, vector<1x8x128xf32>,
    return
  }
  func.func @transform_0(%arg0: i32) -> (i32, i32, i32) {
    %c0_i32 = arith.constant 0 : i32
    %c0_i32_0 = arith.constant 0 : i32
    %c0_i32_1 = arith.constant 0 : i32
    return %arg0, %c0_i32, %c0_i32_0 : i32, i32, i32
  }
  func.func @transform_1(%arg0: i32) -> (i32, i32) {
    %c0_i32 = arith.constant 0 : i32
    %c0_i32_0 = arith.constant 0 : i32
    %c0_i32_1 = arith.constant 0 : i32
    return %c0_i32, %c0_i32_0 : i32, i32
  }
  func.func @transform_2(%arg0: i32) -> (i32, i32) {
    %c0_i32 = arith.constant 0 : i32
    %c0_i32_0 = arith.constant 0 : i32
    %c0_i32_1 = arith.constant 0 : i32
    return %c0_i32, %c0_i32_0 : i32, i32
  }
  func.func @transform_3(%arg0: i32) -> (i32, i32, i32) {
    %c0_i32 = arith.constant 0 : i32
    %c0_i32_0 = arith.constant 0 : i32
    %c0_i32_1 = arith.constant 0 : i32
    return %arg0, %c0_i32, %c0_i32_0 : i32, i32, i32
  }
}

</mosaic_0001>

<llo_original>
// kernel: tpu_custom_call.1
$region0: #{tpu_custom_call.1}
  #allocation0 [shape = 'u32[]', space=smem, size = 0x4, offset = 0x4, fixed_abs, tag = 'smem constant byte address 0x4 - core index']
  #allocation1 [shape = 'u32[144,128]{1,0:T(1,128)}', space=vmem, size = 0x12000, scoped, tag = 'internal scratch']
  %s0 = inlined_call_operand.hbm [shape: f32[2,8,32], index: 0, kind: input, shape index: {}]
  %s1 = inlined_call_operand.hbm [shape: f32[32,384], index: 1, kind: input, shape index: {}]
  %s2 = inlined_call_operand.vmem [shape: f32[1,384], index: 2, kind: input, shape index: {}]
  %s3 = inlined_call_operand.hbm [shape: f32[2,8,128], index: 3, kind: output, shape index: {}]
  %s4 = sld [smem:[#allocation0]]
  $region53: #{tpu_custom_call.1} parent=0
    _
  %s6 = ssub.s32 1, %s4
  %s7 = scalar_select 0, %s6, %s4
  $region1: #{tpu_custom_call.1} parent=0
    #allocation2 [shape = 'u8[8192]{0}', space=vmem, size = 0x2000, scoped, tag = 'input window, operand 0']
    #allocation3 [shape = 's32[2]{0}', space=sflag, size = 0x8, scoped, tag = 'scoped memory for tpu_custom_call.1']
    #allocation4 [shape = 's32[2]{0}', space=sflag, size = 0x8, scoped, tag = 'scoped memory for tpu_custom_call.1']
    #allocation5 [shape = 'u8[49152]{0}', space=vmem, size = 0xc000, scoped, tag = 'input window, operand 1, single buffered']
    #allocation6 [shape = 's32[1]{0}', space=sflag, size = 0x4, scoped, tag = 'scoped memory for tpu_custom_call.1']
    #allocation7 [shape = 'u8[8192]{0}', space=vmem, size = 0x2000, scoped, tag = 'output window, operand 0']
    %8 = vsyncpa [#allocation3], 0
    %s9 = scalar_lea.sflag [#allocation3], 1
    %10 = vsyncpa %s9, 0
    %11 = vsyncpa [#allocation6], 0
    %12 = vsyncpa [#allocation4], 0
    %s13 = scalar_lea.sflag [#allocation4], 1
    %14 = vsyncpa %s13, 0
    loop: start=0, step=1, limit=4
    $region2: #{tpu_custom_call.1} parent=1 // loop_pre_header
      _
    $region3: #{tpu_custom_call.1} parent=1 // loop_header
      %s16 = sphi 0, %s20
      %p17 = scmp.ge.s32.totalorder %s16, 4
      %s26 = sphi 0, %s28
      %s29 = sphi 0, %s26
      %s30 = sphi 0, %s29
      %s46 = sphi 0, %s30
      %s50 = sphi 0, %s50
      %s52 = sphi 0, %s50
      %s53 = sphi 0, %s52
      %s67 = sphi 0, %s53
      %s71 = sphi 0, %s71
      %s73 = sphi 0, %s71
      %s74 = sphi 0, %s73
      %s88 = sphi 0, %s74
      %s94 = sphi 0, %s96
      %s97 = sphi 0, %s94
      %s98 = sphi 0, %s97
      %s114 = sphi 0, %s98
    $region4: #{tpu_custom_call.1} parent=1 // loop_header_branch
      %19 = sbr.rel (%p17) target = $region8
    $region5: #{tpu_custom_call.1} parent=1 // loop_body
      %s21 = ssub.s32 %s16, 1
      %s22 = ssub.s32 %s16, 2
      %s23 = sadd.s32 %s16, 1
      %s24 = ssub.s32 %s16, %s23
      %p25 = scmp.eq.s32.totalorder %s24, 0
      %s27 = sadd.s32 %s26, 1
      %s28 = scalar_select %p25, %s26, %s27
      %p31 = pneg %p25
      %p32 = scmp.eq.s32.totalorder %s16, 1
      %p33 = por %p31, %p32
      %p34 = scmp.ne.s32.totalorder %s26, %s29
      %p35 = scmp.eq.s32.totalorder %s16, 0
      %p36 = por %p34, %p35
      %p37 = scmp.ne.s32.totalorder %s26, %s29
      %p38 = scmp.eq.s32.totalorder %s21, 1
      %p39 = por %p37, %p38
      %p40 = scmp.ne.s32.totalorder %s29, %s30
      %p41 = scmp.eq.s32.totalorder %s21, 0
      %p42 = por %p40, %p41
      %p43 = scmp.ne.s32.totalorder %s29, %s30
      %p44 = scmp.eq.s32.totalorder %s22, 1
      %p45 = por %p43, %p44
      %p47 = scmp.ne.s32.totalorder %s30, %s46
      %p48 = scmp.eq.s32.totalorder %s22, 0
      %p49 = por %p47, %p48
      %s51 = sadd.s32 %s50, 1
      %p54 = scmp.eq.s32.totalorder %s16, 1
      %p55 = scmp.ne.s32.totalorder %s50, %s52
      %p56 = scmp.eq.s32.totalorder %s16, 0
      %p57 = por %p55, %p56
      %p58 = scmp.ne.s32.totalorder %s50, %s52
      %p59 = scmp.eq.s32.totalorder %s21, 1
      %p60 = por %p58, %p59
      %p61 = scmp.ne.s32.totalorder %s52, %s53
      %p62 = scmp.eq.s32.totalorder %s21, 0
      %p63 = por %p61, %p62
      %p64 = scmp.ne.s32.totalorder %s52, %s53
      %p65 = scmp.eq.s32.totalorder %s22, 1
      %p66 = por %p64, %p65
      %p68 = scmp.ne.s32.totalorder %s53, %s67
      %p69 = scmp.eq.s32.totalorder %s22, 0
      %p70 = por %p68, %p69
      %s72 = sadd.s32 %s71, 1
      %p75 = scmp.eq.s32.totalorder %s16, 1
      %p76 = scmp.ne.s32.totalorder %s71, %s73
      %p77 = scmp.eq.s32.totalorder %s16, 0
      %p78 = por %p76, %p77
      %p79 = scmp.ne.s32.totalorder %s71, %s73
      %p80 = scmp.eq.s32.totalorder %s21, 1
      %p81 = por %p79, %p80
      %p82 = scmp.ne.s32.totalorder %s73, %s74
      %p83 = scmp.eq.s32.totalorder %s21, 0
      %p84 = por %p82, %p83
      %p85 = scmp.ne.s32.totalorder %s73, %s74
      %p86 = scmp.eq.s32.totalorder %s22, 1
      %p87 = por %p85, %p86
      %p89 = scmp.ne.s32.totalorder %s74, %s88
      %p90 = scmp.eq.s32.totalorder %s22, 0
      %p91 = por %p89, %p90
      %s92 = ssub.s32 %s16, %s23
      %p93 = scmp.eq.s32.totalorder %s92, 0
      %s95 = sadd.s32 %s94, 1
      %s96 = scalar_select %p93, %s94, %s95
      %p99 = pneg %p93
      %p100 = scmp.eq.s32.totalorder %s16, 1
      %p101 = por %p99, %p100
      %p102 = scmp.ne.s32.totalorder %s94, %s97
      %p103 = scmp.eq.s32.totalorder %s16, 0
      %p104 = por %p102, %p103
      %p105 = scmp.ne.s32.totalorder %s94, %s97
      %p106 = scmp.eq.s32.totalorder %s21, 1
      %p107 = por %p105, %p106
      %p108 = scmp.ne.s32.totalorder %s97, %s98
      %p109 = scmp.eq.s32.totalorder %s21, 0
      %p110 = por %p108, %p109
      %p111 = scmp.ne.s32.totalorder %s97, %s98
      %p112 = scmp.eq.s32.totalorder %s22, 1
      %p113 = por %p111, %p112
      %p115 = scmp.ne.s32.totalorder %s98, %s114
      %p116 = scmp.eq.s32.totalorder %s22, 0
      %p117 = por %p115, %p116
      %p118 = scmp.le.s32.totalorder 1, %s16
      %p119 = scmp.lt.s32.totalorder %s16, 3
      %p120 = pnand %p118, %p119
      %p121 = pneg %p120
      // Predicated region
      $region9: #{tpu_custom_call.1} parent=5 // pred_check
        _
      $region10: #{tpu_custom_call.1} parent=5 // pred_check_branch
        %123 = sbr.rel (%p120) target = $region12
      $region11: #{tpu_custom_call.1} parent=5 // pred_region
        %s124 = ssub.s32 %s16, 1
        // Predicated region
        $region13: #{tpu_custom_call.1} parent=11 // pred_check
          %p125 = pneg %p63
        $region14: #{tpu_custom_call.1} parent=11 // pred_check_branch
          %127 = sbr.rel (%p125) target = $region16
        $region15: #{tpu_custom_call.1} parent=11 // pred_region
          %s129 = ssub.s32 1536, 1536
          %130 = vsyncadd [#allocation6], %s129
          %s131 = sshll.u32 [#allocation5], 4
          %s132 = int_to_ptr.vmem [resolvable:$true] %s131
          %137 = dma.hbm_to_vmem [thread:$0]  %s1, 1536, %s132, [#allocation6], 384, 384, 24
        $region16: #{tpu_custom_call.1} parent=11 // pred_fallthru
          _
        // Predicated region
        $region17: #{tpu_custom_call.1} parent=11 // pred_check
          %p138 = pneg %p84
        $region18: #{tpu_custom_call.1} parent=11 // pred_check_branch
          %140 = sbr.rel (%p138) target = $region20
        $region19: #{tpu_custom_call.1} parent=11 // pred_region
          _
        $region20: #{tpu_custom_call.1} parent=11 // pred_fallthru
          _
      $region12: #{tpu_custom_call.1} parent=5 // pred_fallthru
        _
      %p141 = scmp.lt.s32.totalorder %s16, 2
      // Predicated region
      $region21: #{tpu_custom_call.1} parent=5 // pred_check
        %p142 = pneg %p141
      $region22: #{tpu_custom_call.1} parent=5 // pred_check_branch
        %144 = sbr.rel (%p142) target = $region24
      $region23: #{tpu_custom_call.1} parent=5 // pred_region
        // Predicated region
        $region25: #{tpu_custom_call.1} parent=23 // pred_check
          %p145 = pneg %p36
        $region26: #{tpu_custom_call.1} parent=23 // pred_check_branch
          %147 = sbr.rel (%p145) target = $region28
        $region27: #{tpu_custom_call.1} parent=23 // pred_region
          %s148 = sand.u32 %s26, 1
          %s149 = scalar_lea.sflag [#allocation3], %s148
          %s150 = sand.u32 %s26, 1
          %s151 = smul.addr %s150, 8
          %s152 = scalar_lea.vmem [#allocation2], %s151
          %s154 = ssub.s32 128, 128
          %155 = vsyncadd %s149, %s154
          %s156 = smul.addr %s16, 128
          %s157 = scalar_lea.hbm %s0, %s156
          %s159 = sshll.u32 %s152, 4
          %s160 = int_to_ptr.vmem [resolvable:$true] %s159
          %162 = dma.hbm_to_vmem [thread:$0]  %s157, 128, %s160, %s149
        $region28: #{tpu_custom_call.1} parent=23 // pred_fallthru
          _
      $region24: #{tpu_custom_call.1} parent=5 // pred_fallthru
        _
      %p163 = scmp.le.s32.totalorder 1, %s16
      %p164 = scmp.lt.s32.totalorder %s16, 3
      %p165 = pnand %p163, %p164
      %p166 = pneg %p165
      // Predicated region
      $region29: #{tpu_custom_call.1} parent=5 // pred_check
        _
      $region30: #{tpu_custom_call.1} parent=5 // pred_check_branch
        %168 = sbr.rel (%p165) target = $region32
      $region31: #{tpu_custom_call.1} parent=5 // pred_region
        %s169 = ssub.s32 %s16, 1
        %s170 = sand.u32 %s29, 1
        %s171 = scalar_lea.sflag [#allocation3], %s170
        %s172 = sand.u32 %s29, 1
        %s173 = smul.addr %s172, 8
        %s174 = scalar_lea.vmem [#allocation2], %s173
        // Predicated region
        $region33: #{tpu_custom_call.1} parent=31 // pred_check
          %p175 = pneg %p42
        $region34: #{tpu_custom_call.1} parent=31 // pred_check_branch
          %177 = sbr.rel (%p175) target = $region36
        $region35: #{tpu_custom_call.1} parent=31 // pred_region
          %178 = dma.done %s171, 128
        $region36: #{tpu_custom_call.1} parent=31 // pred_fallthru
          _
        // Predicated region
        $region37: #{tpu_custom_call.1} parent=31 // pred_check
          %p179 = pneg %p63
        $region38: #{tpu_custom_call.1} parent=31 // pred_check_branch
          %181 = sbr.rel (%p179) target = $region40
        $region39: #{tpu_custom_call.1} parent=31 // pred_region
          %182 = dma.done [#allocation6], 1536
        $region40: #{tpu_custom_call.1} parent=31 // pred_fallthru
          _
        %s183 = sand.u32 %s29, 1
        %s184 = scalar_lea.sflag [#allocation3], %s183
        %s185 = sand.u32 %s29, 1
        %s186 = smul.addr %s185, 8
        %s187 = scalar_lea.vmem [#allocation2], %s186
        %p188 = pneg %p42
        %p189 = pneg %p39
        %p190 = pneg %p63
        %p191 = pneg %p60
        %p192 = pneg %p84
        %p193 = pneg %p81
        %p194 = pneg %p110
        %p195 = pneg %p107
        %s196 = sand.u32 %s97, 1
        %s197 = scalar_lea.sflag [#allocation4], %s196
        %s198 = sand.u32 %s97, 1
        %s199 = smul.addr %s198, 8
        %s200 = scalar_lea.vmem [#allocation7], %s199
        %v201 = vld [vmem:[%s174] sm:$0xff]
        %v202 = vld [vmem:[#allocation5] sm:$0xff]
        %v203 = vld [vmem:[#allocation5 + $0x8] sm:$0xff]
        %v204 = vld [vmem:[#allocation5 + $0x10] sm:$0xff]
        %v205 = vld [vmem:[#allocation5 + $0x18] sm:$0xff]
        %v206 = vld [vmem:[#allocation5 + $0x20] sm:$0xff]
        %v207 = vld [vmem:[#allocation5 + $0x28] sm:$0xff]
        %v208 = vld [vmem:[#allocation5 + $0x30] sm:$0xff]
        %v209 = vld [vmem:[#allocation5 + $0x38] sm:$0xff]
        %v210 = vld [vmem:[#allocation5 + $0x40] sm:$0xff]
        %v211 = vld [vmem:[#allocation5 + $0x48] sm:$0xff]
        %v212 = vld [vmem:[#allocation5 + $0x50] sm:$0xff]
        %v213 = vld [vmem:[#allocation5 + $0x58] sm:$0xff]
        %v214 = vld [vmem:[%s2] sm:$0x7]
        %v216 = vlaneseq
        %v217 = vshrl.u32 %v216, 7
        %v218 = vsub.s32 0, %v217
        %v219 = vrot.slane %v214, %v218
        %v220 = vlaneseq
        %v221 = vshrl.u32 %v220, 7
        %v222 = vsub.s32 1, %v221
        %v223 = vrot.slane %v214, %v222
        %v224 = vlaneseq
        %v225 = vshrl.u32 %v224, 7
        %v226 = vsub.s32 2, %v225
        %v227 = vrot.slane %v214, %v226
        %vm231 = vcmask 261120
        %v233 = vsel %vm231, %v201, 0
        %235 = vmatprep.subr.mxu0 %v203
        %236 = vmatpush1.msra.mxu0 %v202
        %237 = vmatprep.subr.mxu0 %v206
        %238 = vmatpush1.msra.mxu0 %v205
        %239 = vmatprep.subr.mxu0 %v209
        %240 = vmatpush1.msra.mxu0 %v208
        %241 = vmatprep.subr.mxu0 %v212
        %242 = vmatpush1.msra.mxu0 %v211
        %243 = vmatprep.subr.mxu0 0.0
        %244 = vmatpush1.msra.mxu0 0.0
        %245 = vmatprep.subr.mxu0 0.0
        %246 = vmatpush1.msra.mxu0 0.0
        %247 = vmatprep.subr.mxu0 0.0
        %248 = vmatpush1.msra.mxu0 0.0
        %249 = vmatprep.subr.mxu0 0.0
        %250 = vmatpush1.msra.mxu0 0.0
        %251 = vmatprep.subr.mxu0 0.0
        %252 = vmatpush1.msra.mxu0 0.0
        %253 = vmatprep.subr.mxu0 0.0
        %254 = vmatpush1.msra.mxu0 0.0
        %255 = vmatprep.subr.mxu0 0.0
        %256 = vmatpush1.msra.mxu0 0.0
        %257 = vmatprep.subr.mxu0 0.0
        %258 = vmatpush1.msra.mxu0 0.0
        %259 = vmatprep.subr.mxu0 0.0
        %260 = vmatpush1.msra.mxu0 0.0
        %261 = vmatprep.subr.mxu0 0.0
        %262 = vmatpush1.msra.mxu0 0.0
        %263 = vmatprep.subr.mxu0 0.0
        %264 = vmatpush1.msra.mxu0 0.0
        %265 = vmatprep.subr.mxu0 0.0
        %266 = vmatpush1.msra.mxu0 0.0
        %267 = vmatprep.subr.mxu0 0.0
        %268 = vmatpush1.msra.mxu0 0.0
        %269 = vmatprep.subr.mxu0 0.0
        %270 = vmatpush1.msra.mxu0 0.0
        %271 = vmatprep.subr.mxu0 0.0
        %272 = vmatpush1.msra.mxu0 0.0
        %273 = vmatprep.subr.mxu0 0.0
        %274 = vmatpush1.msra.mxu0 0.0
        %275 = vmatprep.subr.mxu0 0.0
        %276 = vmatpush1.msra.mxu0 0.0
        %277 = vmatprep.subr.mxu0 0.0
        %278 = vmatpush1.msra.mxu0 0.0
        %279 = vmatprep.subr.mxu0 0.0
        %280 = vmatpush1.msra.mxu0 0.0
        %281 = vmatprep.subr.mxu0 0.0
        %282 = vmatpush1.msra.mxu0 0.0
        %283 = vmatprep.subr.mxu0 0.0
        %284 = vmatpush1.msra.mxu0 0.0
        %285 = vmatprep.subr.mxu0 0.0
        %286 = vmatpush1.msra.mxu0 0.0
        %287 = vmatprep.subr.mxu0 0.0
        %288 = vmatpush1.msra.mxu0 0.0
        %289 = vmatprep.subr.mxu0 0.0
        %290 = vmatpush1.msra.mxu0 0.0
        %291 = vmatprep.subr.mxu0 0.0
        %292 = vmatpush1.msra.mxu0 0.0
        %293 = vmatprep.subr.mxu0 0.0
        %294 = vmatpush1.msra.mxu0 0.0
        %295 = vmatprep.subr.mxu0 0.0
        %296 = vmatpush1.msra.mxu0 0.0
        %297 = vmatprep.subr.mxu0 0.0
        %298 = vmatpush1.msra.mxu0 0.0
        %299 = vmatprep.mubr.f32.mxu0 0.0
        %300 = vmatmul.mubr.f32.gmra.mrb[0].mxu0 %v233
        %v301 = vpop.f32.mrb[0].mxu0
        %v302 = vadd.f32 %v219, %v301
        %v303 = vpop.f32.mrb[0].mxu0
        %v304 = vadd.f32 %v223, %v303
        %305 = vdwg.mxu0
        %306 = vmatprep.subr.mxu0 0.0
        %307 = vmatpush1.msra.mxu0 %v204
        %308 = vmatprep.subr.mxu0 0.0
        %309 = vmatpush1.msra.mxu0 %v207
        %310 = vmatprep.subr.mxu0 0.0
        %311 = vmatpush1.msra.mxu0 %v210
        %312 = vmatprep.subr.mxu0 0.0
        %313 = vmatpush1.msra.mxu0 %v213
        %314 = vmatprep.subr.mxu0 0.0
        %315 = vmatpush1.msra.mxu0 0.0
        %316 = vmatprep.subr.mxu0 0.0
        %317 = vmatpush1.msra.mxu0 0.0
        %318 = vmatprep.subr.mxu0 0.0
        %319 = vmatpush1.msra.mxu0 0.0
        %320 = vmatprep.subr.mxu0 0.0
        %321 = vmatpush1.msra.mxu0 0.0
        %322 = vmatprep.subr.mxu0 0.0
        %323 = vmatpush1.msra.mxu0 0.0
        %324 = vmatprep.subr.mxu0 0.0
        %325 = vmatpush1.msra.mxu0 0.0
        %326 = vmatprep.subr.mxu0 0.0
        %327 = vmatpush1.msra.mxu0 0.0
        %328 = vmatprep.subr.mxu0 0.0
        %329 = vmatpush1.msra.mxu0 0.0
        %330 = vmatprep.subr.mxu0 0.0
        %331 = vmatpush1.msra.mxu0 0.0
        %332 = vmatprep.subr.mxu0 0.0
        %333 = vmatpush1.msra.mxu0 0.0
        %334 = vmatprep.subr.mxu0 0.0
        %335 = vmatpush1.msra.mxu0 0.0
        %336 = vmatprep.subr.mxu0 0.0
        %337 = vmatpush1.msra.mxu0 0.0
        %338 = vmatprep.subr.mxu0 0.0
        %339 = vmatpush1.msra.mxu0 0.0
        %340 = vmatprep.subr.mxu0 0.0
        %341 = vmatpush1.msra.mxu0 0.0
        %342 = vmatprep.subr.mxu0 0.0
        %343 = vmatpush1.msra.mxu0 0.0
        %344 = vmatprep.subr.mxu0 0.0
        %345 = vmatpush1.msra.mxu0 0.0
        %346 = vmatprep.subr.mxu0 0.0
        %347 = vmatpush1.msra.mxu0 0.0
        %348 = vmatprep.subr.mxu0 0.0
        %349 = vmatpush1.msra.mxu0 0.0
        %350 = vmatprep.subr.mxu0 0.0
        %351 = vmatpush1.msra.mxu0 0.0
        %352 = vmatprep.subr.mxu0 0.0
        %353 = vmatpush1.msra.mxu0 0.0
        %354 = vmatprep.subr.mxu0 0.0
        %355 = vmatpush1.msra.mxu0 0.0
        %356 = vmatprep.subr.mxu0 0.0
        %357 = vmatpush1.msra.mxu0 0.0
        %358 = vmatprep.subr.mxu0 0.0
        %359 = vmatpush1.msra.mxu0 0.0
        %360 = vmatprep.subr.mxu0 0.0
        %361 = vmatpush1.msra.mxu0 0.0
        %362 = vmatprep.subr.mxu0 0.0
        %363 = vmatpush1.msra.mxu0 0.0
        %364 = vmatprep.subr.mxu0 0.0
        %365 = vmatpush1.msra.mxu0 0.0
        %366 = vmatprep.subr.mxu0 0.0
        %367 = vmatpush1.msra.mxu0 0.0
        %368 = vmatprep.subr.mxu0 0.0
        %369 = vmatpush1.msra.mxu0 0.0
        %370 = vmatprep.mubr.f32.mxu0 0.0
        %371 = vmatmul.mubr.f32.gmra.mrb[0].mxu0 %v233
        %v372 = vpop.f32.mrb[0].mxu0
        %v373 = vadd.f32 %v227, %v372
        %v374 = vpop.f32.mrb[0].mxu0
        %375 = vdwg.mxu0
        %v376 = vmul.f32 %v302, 0.17677669
        %377 = vmatprep.subr.mxu0 0.0
        %378 = vmatpush1.xpose.msra.mxu0 %v304
        %379 = vmatprep.subr.mxu0 0.0
        %380 = vmatpush1.xpose.msra.mxu0 0.0
        %381 = vmatprep.subr.mxu0 0.0
        %382 = vmatpush1.xpose.msra.mxu0 0.0
        %383 = vmatprep.subr.mxu0 0.0
        %384 = vmatpush1.xpose.msra.mxu0 0.0
        %385 = vmatprep.subr.mxu0 0.0
        %386 = vmatpush1.xpose.msra.mxu0 0.0
        %387 = vmatprep.subr.mxu0 0.0
        %388 = vmatpush1.xpose.msra.mxu0 0.0
        %389 = vmatprep.subr.mxu0 0.0
        %390 = vmatpush1.xpose.msra.mxu0 0.0
        %391 = vmatprep.subr.mxu0 0.0
        %392 = vmatpush1.xpose.msra.mxu0 0.0
        %393 = vmatprep.subr.mxu0 0.0
        %394 = vmatpush1.xpose.msra.mxu0 0.0
        %395 = vmatprep.subr.mxu0 0.0
        %396 = vmatpush1.xpose.msra.mxu0 0.0
        %397 = vmatprep.subr.mxu0 0.0
        %398 = vmatpush1.xpose.msra.mxu0 0.0
        %399 = vmatprep.subr.mxu0 0.0
        %400 = vmatpush1.xpose.msra.mxu0 0.0
        %401 = vmatprep.subr.mxu0 0.0
        %402 = vmatpush1.xpose.msra.mxu0 0.0
        %403 = vmatprep.subr.mxu0 0.0
        %404 = vmatpush1.xpose.msra.mxu0 0.0
        %405 = vmatprep.subr.mxu0 0.0
        %406 = vmatpush1.xpose.msra.mxu0 0.0
        %407 = vmatprep.subr.mxu0 0.0
        %408 = vmatpush1.xpose.msra.mxu0 0.0
        %409 = vmatprep.subr.mxu0 0.0
        %410 = vmatpush1.xpose.msra.mxu0 0.0
        %411 = vmatprep.subr.mxu0 0.0
        %412 = vmatpush1.xpose.msra.mxu0 0.0
        %413 = vmatprep.subr.mxu0 0.0
        %414 = vmatpush1.xpose.msra.mxu0 0.0
        %415 = vmatprep.subr.mxu0 0.0
        %416 = vmatpush1.xpose.msra.mxu0 0.0
        %417 = vmatprep.subr.mxu0 0.0
        %418 = vmatpush1.xpose.msra.mxu0 0.0
        %419 = vmatprep.subr.mxu0 0.0
        %420 = vmatpush1.xpose.msra.mxu0 0.0
        %421 = vmatprep.subr.mxu0 0.0
        %422 = vmatpush1.xpose.msra.mxu0 0.0
        %423 = vmatprep.subr.mxu0 0.0
        %424 = vmatpush1.xpose.msra.mxu0 0.0
        %425 = vmatprep.subr.mxu0 0.0
        %426 = vmatpush1.xpose.msra.mxu0 0.0
        %427 = vmatprep.subr.mxu0 0.0
        %428 = vmatpush1.xpose.msra.mxu0 0.0
        %429 = vmatprep.subr.mxu0 0.0
        %430 = vmatpush1.xpose.msra.mxu0 0.0
        %431 = vmatprep.subr.mxu0 0.0
        %432 = vmatpush1.xpose.msra.mxu0 0.0
        %433 = vmatprep.subr.mxu0 0.0
        %434 = vmatpush1.xpose.msra.mxu0 0.0
        %435 = vmatprep.subr.mxu0 0.0
        %436 = vmatpush1.xpose.msra.mxu0 0.0
        %437 = vmatprep.subr.mxu0 0.0
        %438 = vmatpush1.xpose.msra.mxu0 0.0
        %439 = vmatprep.subr.mxu0 0.0
        %440 = vmatpush1.xpose.msra.mxu0 0.0
        %441 = vmatprep.mubr.f32.mxu0 0.0
        %442 = vmatmul.mubr.f32.gmra.mrb[0].mxu0 %v376
        %v443 = vpop.f32.mrb[0].mxu0
        %v444 = vadd.f32 0.0, %v443
        %v445 = vpop.f32.mrb[0].mxu0
        %446 = vdwg.mxu0
        %v447 = vlaneseq
        %v448 = vshrl.u32 %v447, 7
        %v449 = vlaneseq
        %v450 = vand.u32 %v449, 127
        %vm451 = vcmp.le.s32.totalorder %v450, %v448
        %v452 = vsel %vm451, %v444, -inf
        %vm453 = vcmask 64512
        %v454 = vsel %vm453, %v452, -inf
        %455 = vmax.xlane.f32.xlu0 %v454
        %v456 = vpop.xlane.xlu0 %455
        %v457 = vsub.f32 %v452, %v456
        %v458 = vmul.f32 %v457, 1.442695
        %v459 = vpow.pop %v458
        %v460 = vsel %vm453, %v459, 0.0
        %461 = vadd.xlane.f32.xlu0 %v460
        %v462 = vpop.xlane.xlu0 %461
        %v464 = vsel %vm453, %v459, 0
        %466 = vmatprep.subr.mxu0 0.0
        %467 = vmatpush1.msra.mxu0 %v373
        %468 = vmatprep.subr.mxu0 0.0
        %469 = vmatpush1.msra.mxu0 0.0
        %470 = vmatprep.subr.mxu0 0.0
        %471 = vmatpush1.msra.mxu0 0.0
        %472 = vmatprep.subr.mxu0 0.0
        %473 = vmatpush1.msra.mxu0 0.0
        %474 = vmatprep.subr.mxu0 0.0
        %475 = vmatpush1.msra.mxu0 0.0
        %476 = vmatprep.subr.mxu0 0.0
        %477 = vmatpush1.msra.mxu0 0.0
        %478 = vmatprep.subr.mxu0 0.0
        %479 = vmatpush1.msra.mxu0 0.0
        %480 = vmatprep.subr.mxu0 0.0
        %481 = vmatpush1.msra.mxu0 0.0
        %482 = vmatprep.subr.mxu0 0.0
        %483 = vmatpush1.msra.mxu0 0.0
        %484 = vmatprep.subr.mxu0 0.0
        %485 = vmatpush1.msra.mxu0 0.0
        %486 = vmatprep.subr.mxu0 0.0
        %487 = vmatpush1.msra.mxu0 0.0
        %488 = vmatprep.subr.mxu0 0.0
        %489 = vmatpush1.msra.mxu0 0.0
        %490 = vmatprep.subr.mxu0 0.0
        %491 = vmatpush1.msra.mxu0 0.0
        %492 = vmatprep.subr.mxu0 0.0
        %493 = vmatpush1.msra.mxu0 0.0
        %494 = vmatprep.subr.mxu0 0.0
        %495 = vmatpush1.msra.mxu0 0.0
        %496 = vmatprep.subr.mxu0 0.0
        %497 = vmatpush1.msra.mxu0 0.0
        %498 = vmatprep.subr.mxu0 0.0
        %499 = vmatpush1.msra.mxu0 0.0
        %500 = vmatprep.subr.mxu0 0.0
        %501 = vmatpush1.msra.mxu0 0.0
        %502 = vmatprep.subr.mxu0 0.0
        %503 = vmatpush1.msra.mxu0 0.0
        %504 = vmatprep.subr.mxu0 0.0
        %505 = vmatpush1.msra.mxu0 0.0
        %506 = vmatprep.subr.mxu0 0.0
        %507 = vmatpush1.msra.mxu0 0.0
        %508 = vmatprep.subr.mxu0 0.0
        %509 = vmatpush1.msra.mxu0 0.0
        %510 = vmatprep.subr.mxu0 0.0
        %511 = vmatpush1.msra.mxu0 0.0
        %512 = vmatprep.subr.mxu0 0.0
        %513 = vmatpush1.msra.mxu0 0.0
        %514 = vmatprep.subr.mxu0 0.0
        %515 = vmatpush1.msra.mxu0 0.0
        %516 = vmatprep.subr.mxu0 0.0
        %517 = vmatpush1.msra.mxu0 0.0
        %518 = vmatprep.subr.mxu0 0.0
        %519 = vmatpush1.msra.mxu0 0.0
        %520 = vmatprep.subr.mxu0 0.0
        %521 = vmatpush1.msra.mxu0 0.0
        %522 = vmatprep.subr.mxu0 0.0
        %523 = vmatpush1.msra.mxu0 0.0
        %524 = vmatprep.subr.mxu0 0.0
        %525 = vmatpush1.msra.mxu0 0.0
        %526 = vmatprep.subr.mxu0 0.0
        %527 = vmatpush1.msra.mxu0 0.0
        %528 = vmatprep.subr.mxu0 0.0
        %529 = vmatpush1.msra.mxu0 0.0
        %530 = vmatprep.mubr.f32.mxu0 0.0
        %531 = vmatmul.mubr.f32.gmra.mrb[0].mxu0 %v464
        %v532 = vpop.f32.mrb[0].mxu0
        %v533 = vadd.f32 0.0, %v532
        %v534 = vpop.f32.mrb[0].mxu0
        %535 = vdwg.mxu0
        %v536 = vrcp.pop %v462
        %v537 = vmul.f32 %v533, %v536
        %538 = vst [vmem:[%s200] sm:$0xff] %v537
        %s539 = sand.u32 %s97, 1
        %s540 = scalar_lea.sflag [#allocation4], %s539
        %s541 = sand.u32 %s97, 1
        %s542 = smul.addr %s541, 8
        %s543 = scalar_lea.vmem [#allocation7], %s542
        // Predicated region
        $region41: #{tpu_custom_call.1} parent=31 // pred_check
          %p544 = pneg %p107
        $region42: #{tpu_custom_call.1} parent=31 // pred_check_branch
          %546 = sbr.rel (%p544) target = $region44
        $region43: #{tpu_custom_call.1} parent=31 // pred_region
          %s548 = ssub.s32 128, 128
          %549 = vsyncadd %s540, %s548
          %s550 = smul.addr %s21, 128
          %s551 = scalar_lea.hbm %s3, %s550
          %s553 = sshll.u32 %s543, 4
          %s554 = int_to_ptr.vmem [resolvable:$true] %s553
          %556 = dma.vmem_to_hbm [thread:$0]  %s554, 128, %s551, %s540
        $region44: #{tpu_custom_call.1} parent=31 // pred_fallthru
          _
      $region32: #{tpu_custom_call.1} parent=5 // pred_fallthru
        _
      %p557 = scmp.le.s32.totalorder 2, %s16
      // Predicated region
      $region45: #{tpu_custom_call.1} parent=5 // pred_check
        %p558 = pneg %p557
      $region46: #{tpu_custom_call.1} parent=5 // pred_check_branch
        %560 = sbr.rel (%p558) target = $region48
      $region47: #{tpu_custom_call.1} parent=5 // pred_region
        %s561 = ssub.s32 %s16, 2
        // Predicated region
        $region49: #{tpu_custom_call.1} parent=47 // pred_check
          %p562 = pneg %p113
        $region50: #{tpu_custom_call.1} parent=47 // pred_check_branch
          %564 = sbr.rel (%p562) target = $region52
        $region51: #{tpu_custom_call.1} parent=47 // pred_region
          %s565 = sand.u32 %s98, 1
          %s566 = scalar_lea.sflag [#allocation4], %s565
          %s567 = sand.u32 %s98, 1
          %s568 = smul.addr %s567, 8
          %s569 = scalar_lea.vmem [#allocation7], %s568
          %570 = dma.done %s566, 128
        $region52: #{tpu_custom_call.1} parent=47 // pred_fallthru
          _
      $region48: #{tpu_custom_call.1} parent=5 // pred_fallthru
        _
    $region6: #{tpu_custom_call.1} parent=1 // loop_footer
      %s20 = sadd.s32 1, %s16
    $region7: #{tpu_custom_call.1} parent=1 // loop_footer_branch
      %15 = sbr.rel target = $region3
    $region8: #{tpu_custom_call.1} parent=1 // loop_exit
      _
    %571 = vsyncpa [#allocation3], 1
    %s572 = scalar_lea.sflag [#allocation3], 1
    %573 = vsyncpa %s572, 1
    %574 = vsyncpa [#allocation6], 1
    %575 = vsyncpa [#allocation4], 1
    %s576 = scalar_lea.sflag [#allocation4], 1
    %577 = vsyncpa %s576, 1

</llo_original>
